<compile_context>
chip_gen: v6e
topology: v6e:2x2x1
jax: 0.10.0
libtpu: 0.0.40
codegen_flags: <defaults>
</compile_context>

<pallas_src>
import functools
import math

import jax
import jax.numpy as jnp
from jax import lax
from jax.experimental import pallas as pl
from jax.experimental.pallas import tpu as pltpu


LANE = 128      # lane (last-dim) padding multiple
SUBLANE = 16    # sublane (second-last dim) multiple; 16 covers bf16 packing


def _round_up(v, m):
    return ((v + m - 1) // m) * m


def _pad2d(a, rows, cols):
    """Zero-pad a 2-D array to (rows, cols)."""
    return jnp.zeros((rows, cols), a.dtype).at[: a.shape[0], : a.shape[1]].set(a)


# ------------------------------ Pallas kernel ------------------------------ #

def _graff_fused_kernel(adj_ref, xin_ref, enc_wt_ref, enc_b_ref,
                        w_eff_ref, dec_wt_ref, dec_b_ref,
                        out_ref, energy_ref, *, nlayers, n_real, n_pad):
    """Single invocation: encoder -> nlayers GRAFF steps (unrolled) -> decoder."""
    # ---- encoder: X = ReLU(x @ W_enc^T + b_enc) ----
    h = jnp.dot(xin_ref[...], enc_wt_ref[...],
                preferred_element_type=jnp.float32)
    x = jnp.maximum(h + enc_b_ref[...], 0.0)
    if n_pad > n_real:
        # Keep padded rows exactly zero (the bias broadcast would otherwise
        # make them nonzero and bias the Dirichlet energies).
        row_ids = lax.broadcasted_iota(jnp.int32, x.shape, 0)
        x = jnp.where(row_ids < n_real, x, 0.0)

    adj = adj_ref[...]        # bf16, stays resident in VMEM for all layers
    w_eff = w_eff_ref[...]    # bf16, step_size * 0.5*(W + W^T)

    # ax = adj_norm @ X  (bf16 operands, f32 accumulation on the MXU)
    ax = jnp.dot(adj, x.astype(jnp.bfloat16), preferred_element_type=jnp.float32)

    # Dirichlet energy: trace((L X)^T X) = sum((X - adj_norm X) * X), f32.
    energy_ref[0] = jnp.sum((x - ax) * x)

    # ---- GRAFF layers, statically unrolled (nlayers is compile-time) ----
    for i in range(nlayers):
        inter = jnp.dot(ax.astype(jnp.bfloat16), w_eff,
                        preferred_element_type=jnp.float32)
        conv_out = x + inter                      # GRAFFLayer.forward output
        x = x + jnp.maximum(conv_out, 0.0)        # X <- X + ReLU(conv(X))
        # F.dropout in eval mode is the identity.
        ax = jnp.dot(adj, x.astype(jnp.bfloat16),
                     preferred_element_type=jnp.float32)
        energy_ref[i + 1] = jnp.sum((x - ax) * x)

    # ---- decoder: out = X @ W_dec^T + b_dec ----
    y = jnp.dot(x.astype(jnp.bfloat16), dec_wt_ref[...],
                preferred_element_type=jnp.float32)
    out_ref[...] = y + dec_b_ref[...]


# ----------------------------- JAX wrappers -------------------------------- #

def sym_norm_adj(A):
    """adj_norm = D~^{-1/2} (A + I) D~^{-1/2}  (matches the PyTorch reference)."""
    n = A.shape[0]
    A_tilde = A + jnp.eye(n, dtype=A.dtype)
    deg = jnp.sum(A_tilde, axis=0)
    d_inv_sqrt = 1.0 / jnp.sqrt(deg)
    d_inv_sqrt = jnp.where(jnp.isinf(d_inv_sqrt), 0.0, d_inv_sqrt)
    return d_inv_sqrt[:, None] * A_tilde * d_inv_sqrt[None, :]


def graff_forward(x, adj, params, *, nlayers, step_size):
    """Full fused GRAFF forward.  Returns (logits [N, nclass], energies [nlayers+1])."""
    n, nfeat = x.shape
    nhid = params["enc_w"].shape[0]
    nclass = params["dec_w"].shape[0]

    # Lane dims (last) padded to 128; node (sublane) dim only to 16.
    n_p = _round_up(n, SUBLANE)
    f_p = _round_up(nfeat, LANE)
    h_p = _round_up(nhid, LANE)
    c_p = _round_up(nclass, LANE)

    adj_norm = sym_norm_adj(adj.astype(jnp.float32))
    adj_p = _pad2d(adj_norm, n_p, n_p).astype(jnp.bfloat16)

    x_p = _pad2d(x.astype(jnp.float32), n_p, f_p).astype(jnp.bfloat16)
    enc_wt = _pad2d(jnp.transpose(params["enc_w"]), f_p, h_p).astype(jnp.bfloat16)
    enc_b = _pad2d(params["enc_b"].reshape(1, nhid).astype(jnp.float32), 1, h_p)

    # Symmetrize once, fold step_size in once, bf16 for the MXU.
    w_star = 0.5 * (params["conv_w"] + jnp.transpose(params["conv_w"]))
    w_eff = _pad2d(step_size * w_star, h_p, h_p).astype(jnp.bfloat16)

    dec_wt = _pad2d(jnp.transpose(params["dec_w"]), h_p, c_p).astype(jnp.bfloat16)
    dec_b = _pad2d(params["dec_b"].reshape(1, nclass).astype(jnp.float32), 1, c_p)

    vmem = pl.BlockSpec(memory_space=pltpu.MemorySpace.VMEM)
    smem = pl.BlockSpec(memory_space=pltpu.MemorySpace.SMEM)

    # TODO(synk): for graphs too large for a VMEM-resident adj, tile adj over
    # (N/tm, N/tk) with a k-axis accumulator instead of whole-array blocks.
    out_p, energies = pl.pallas_call(
        functools.partial(_graff_fused_kernel, nlayers=nlayers,
                          n_real=n, n_pad=n_p),
        in_specs=[vmem, vmem, vmem, vmem, vmem, vmem, vmem],
        out_specs=[vmem, smem],
        out_shape=[
            jax.ShapeDtypeStruct((n_p, c_p), jnp.float32),
            jax.ShapeDtypeStruct((nlayers + 1,), jnp.float32),
        ],
    )(adj_p, x_p, enc_wt, enc_b, w_eff, dec_wt, dec_b)

    return out_p[:n, :nclass], energies


# ------------------------- pure-JAX reference (f32) ------------------------ #

def graff_forward_ref(x, adj, params, *, nlayers, step_size):
    adj_norm = sym_norm_adj(adj)
    L = jnp.eye(adj.shape[0], dtype=jnp.float32) - adj_norm
    X = jnp.maximum(x @ params["enc_w"].T + params["enc_b"], 0.0)
    energies = [jnp.sum((L @ X) * X)]
    w_star = 0.5 * (params["conv_w"] + params["conv_w"].T)
    for _ in range(nlayers):
        inter = (step_size * (adj_norm @ X)) @ w_star
        X = X + jnp.maximum(X + inter, 0.0)
        energies.append(jnp.sum((L @ X) * X))
    out = X @ params["dec_w"].T + params["dec_b"]
    return out, jnp.stack(energies)


# ----------------------------- parameter init ------------------------------ #

def init_params(key, nfeat, nhid, nclass):
    """Matches GRAFF.reset_params: weights ~ U(-1/sqrt(nhid), 1/sqrt(nhid));
    biases keep the PyTorch Linear default U(-1/sqrt(fan_in), 1/sqrt(fan_in))."""
    stdv = 1.0 / math.sqrt(nhid)
    k_enc_w, k_enc_b, k_conv_w, k_dec_w, k_dec_b = jax.random.split(key, 5)
    return {
        "enc_w": jax.random.uniform(k_enc_w, (nhid, nfeat), jnp.float32, -stdv, stdv),
        "enc_b": jax.random.uniform(k_enc_b, (nhid,), jnp.float32,
                                    -1.0 / math.sqrt(nfeat), 1.0 / math.sqrt(nfeat)),
        "conv_w": jax.random.uniform(k_conv_w, (nhid, nhid), jnp.float32, -stdv, stdv),
        "dec_w": jax.random.uniform(k_dec_w, (nclass, nhid), jnp.float32, -stdv, stdv),
        "dec_b": jax.random.uniform(k_dec_b, (nclass,), jnp.float32,
                                    -1.0 / math.sqrt(nhid), 1.0 / math.sqrt(nhid)),
    }


# --------------------------------- main ------------------------------------ #

if __name__ == "__main__":
    N, nfeat, nhid, nclass = 64, 16, 32, 8
    nlayers = 2
    step_size = 0.25

    key = jax.random.PRNGKey(0)
    k_x, k_adj, k_param = jax.random.split(key, 3)

    # node features [N, nfeat]
    x = jax.random.normal(k_x, (N, nfeat), dtype=jnp.float32)

    # random symmetric binary adjacency, no self loops (what to_dense_adj yields)
    upper = (jax.random.uniform(k_adj, (N, N)) < 0.1).astype(jnp.float32)
    upper = jnp.triu(upper, k=1)
    adj = upper + upper.T

    params = init_params(k_param, nfeat, nhid, nclass)

    fwd = jax.jit(functools.partial(graff_forward,
                                    nlayers=nlayers, step_size=step_size))
    out, energies = fwd(x, adj, params)
    out = jax.block_until_ready(out)
    energies = jax.block_until_ready(energies)

    # sanity vs. pure-JAX f32 reference (loose tolerance: bf16 MXU operands)
    out_ref, energies_ref = graff_forward_ref(
        x, adj, params, nlayers=nlayers, step_size=step_size)

    assert out.shape == (N, nclass)
    assert energies.shape == (nlayers + 1,)
    assert bool(jnp.all(jnp.isfinite(out))) and bool(jnp.all(jnp.isfinite(energies)))
    assert bool(jnp.allclose(out, out_ref, rtol=1e-1, atol=1e-1)), \
        float(jnp.max(jnp.abs(out - out_ref)))
    assert bool(jnp.allclose(energies, energies_ref, rtol=1e-1, atol=1e-1)), \
        float(jnp.max(jnp.abs(energies - energies_ref)))

    print("KERNEL_OK")
</pallas_src>

<mosaic_0001>
module attributes {stable_mosaic.version = 11 : i64} {
  func.func @_graff_fused_kernel(%arg0: memref<64x64xbf16, #tpu.memory_space<vmem>>, %arg1: memref<64x128xbf16, #tpu.memory_space<vmem>>, %arg2: memref<128x128xbf16, #tpu.memory_space<vmem>>, %arg3: memref<1x128xf32, #tpu.memory_space<vmem>>, %arg4: memref<128x128xbf16, #tpu.memory_space<vmem>>, %arg5: memref<128x128xbf16, #tpu.memory_space<vmem>>, %arg6: memref<1x128xf32, #tpu.memory_space<vmem>>, %arg7: memref<64x128xf32, #tpu.memory_space<vmem>>, %arg8: memref<3xf32, #tpu.memory_space<smem>>) attributes {dimension_semantics = [], scalar_prefetch = 0 : i64, scratch_operands = 0 : i64, tpu.core_type = #tpu.core_type<tc>} {
    %c0 = arith.constant 0 : index
    %c0_0 = arith.constant 0 : index
    %0 = vector.load %arg1[%c0, %c0_0] : memref<64x128xbf16, #tpu.memory_space<vmem>>, vector<64x128xbf16>
    %c0_1 = arith.constant 0 : index
    %c0_2 = arith.constant 0 : index
    %1 = vector.load %arg2[%c0_1, %c0_2] : memref<128x128xbf16, #tpu.memory_space<vmem>>, vector<128x128xbf16>
    %cst = arith.constant dense<0.000000e+00> : vector<64x128xf32>
    %2 = tpu.matmul %0, %1, %cst {dimension_numbers = #tpu.dot_dimension_numbers<[1], [0], [0], [1], [0, 0, 1, 1], [], []>} : vector<64x128xbf16>, vector<128x128xbf16>, vector<64x128xf32> -> vector<64x128xf32>
    %c0_3 = arith.constant 0 : index
    %c0_4 = arith.constant 0 : index
    %3 = vector.load %arg3[%c0_3, %c0_4] : memref<1x128xf32, #tpu.memory_space<vmem>>, vector<1x128xf32>
    %4 = vector.broadcast %3 : vector<1x128xf32> to vector<64x128xf32>
    %5 = arith.addf %2, %4 : vector<64x128xf32>
    %cst_5 = arith.constant 0.000000e+00 : f32
    %6 = vector.broadcast %cst_5 : f32 to vector<64x128xf32>
    %7 = arith.maximumf %5, %6 : vector<64x128xf32>
    %c0_6 = arith.constant 0 : index
    %c0_7 = arith.constant 0 : index
    %8 = vector.load %arg0[%c0_6, %c0_7] : memref<64x64xbf16, #tpu.memory_space<vmem>>, vector<64x64xbf16>
    %c0_8 = arith.constant 0 : index
    %c0_9 = arith.constant 0 : index
    %9 = vector.load %arg4[%c0_8, %c0_9] : memref<128x128xbf16, #tpu.memory_space<vmem>>, vector<128x128xbf16>
    %10 = arith.truncf %7 : vector<64x128xf32> to vector<64x128xbf16>
    %cst_10 = arith.constant dense<0.000000e+00> : vector<64x128xf32>
    %11 = tpu.matmul %8, %10, %cst_10 {dimension_numbers = #tpu.dot_dimension_numbers<[1], [0], [0], [1], [0, 0, 1, 1], [], []>} : vector<64x64xbf16>, vector<64x128xbf16>, vector<64x128xf32> -> vector<64x128xf32>
    %12 = arith.subf %7, %11 : vector<64x128xf32>
    %13 = arith.mulf %12, %7 : vector<64x128xf32>
    %14 = vector.shape_cast %13 : vector<64x128xf32> to vector<1x64x128xf32>
    %cst_11 = arith.constant dense<0.000000e+00> : vector<1xf32>
    %15 = vector.multi_reduction <add>, %14, %cst_11 [1, 2] : vector<1x64x128xf32> to vector<1xf32>
    %16 = vector.shape_cast %15 : vector<1xf32> to vector<1x1x1xf32>
    %17 = vector.extract %16[0, 0, 0] : f32 from vector<1x1x1xf32>
    %c0_12 = arith.constant 0 : index
    %18 = memref.load %arg8[%c0_12] : memref<3xf32, #tpu.memory_space<smem>>
    memref.store %17, %arg8[%c0_12] : memref<3xf32, #tpu.memory_space<smem>>
    %19 = arith.truncf %11 : vector<64x128xf32> to vector<64x128xbf16>
    %cst_13 = arith.constant dense<0.000000e+00> : vector<64x128xf32>
    %20 = tpu.matmul %19, %9, %cst_13 {dimension_numbers = #tpu.dot_dimension_numbers<[1], [0], [0], [1], [0, 0, 1, 1], [], []>} : vector<64x128xbf16>, vector<128x128xbf16>, vector<64x128xf32> -> vector<64x128xf32>
    %21 = arith.addf %7, %20 : vector<64x128xf32>
    %cst_14 = arith.constant 0.000000e+00 : f32
    %22 = vector.broadcast %cst_14 : f32 to vector<64x128xf32>
    %23 = arith.maximumf %21, %22 : vector<64x128xf32>
    %24 = arith.addf %7, %23 : vector<64x128xf32>
    %25 = arith.truncf %24 : vector<64x128xf32> to vector<64x128xbf16>
    %cst_15 = arith.constant dense<0.000000e+00> : vector<64x128xf32>
    %26 = tpu.matmul %8, %25, %cst_15 {dimension_numbers = #tpu.dot_dimension_numbers<[1], [0], [0], [1], [0, 0, 1, 1], [], []>} : vector<64x64xbf16>, vector<64x128xbf16>, vector<64x128xf32> -> vector<64x128xf32>
    %27 = arith.subf %24, %26 : vector<64x128xf32>
    %28 = arith.mulf %27, %24 : vector<64x128xf32>
    %29 = vector.shape_cast %28 : vector<64x128xf32> to vector<1x64x128xf32>
    %cst_16 = arith.constant dense<0.000000e+00> : vector<1xf32>
    %30 = vector.multi_reduction <add>, %29, %cst_16 [1, 2] : vector<1x64x128xf32> to vector<1xf32>
    %31 = vector.shape_cast %30 : vector<1xf32> to vector<1x1x1xf32>
    %32 = vector.extract %31[0, 0, 0] : f32 from vector<1x1x1xf32>
    %c1 = arith.constant 1 : index
    %33 = memref.load %arg8[%c1] : memref<3xf32, #tpu.memory_space<smem>>
    memref.store %32, %arg8[%c1] : memref<3xf32, #tpu.memory_space<smem>>
    %34 = arith.truncf %26 : vector<64x128xf32> to vector<64x128xbf16>
    %cst_17 = arith.constant dense<0.000000e+00> : vector<64x128xf32>
    %35 = tpu.matmul %34, %9, %cst_17 {dimension_numbers = #tpu.dot_dimension_numbers<[1], [0], [0], [1], [0, 0, 1, 1], [], []>} : vector<64x128xbf16>, vector<128x128xbf16>, vector<64x128xf32> -> vector<64x128xf32>
    %36 = arith.addf %24, %35 : vector<64x128xf32>
    %cst_18 = arith.constant 0.000000e+00 : f32
    %37 = vector.broadcast %cst_18 : f32 to vector<64x128xf32>
    %38 = arith.maximumf %36, %37 : vector<64x128xf32>
    %39 = arith.addf %24, %38 : vector<64x128xf32>
    %40 = arith.truncf %39 : vector<64x128xf32> to vector<64x128xbf16>
    %cst_19 = arith.constant dense<0.000000e+00> : vector<64x128xf32>
    %41 = tpu.matmul %8, %40, %cst_19 {dimension_numbers = #tpu.dot_dimension_numbers<[1], [0], [0], [1], [0, 0, 1, 1], [], []>} : vector<64x64xbf16>, vector<64x128xbf16>, vector<64x128xf32> -> vector<64x128xf32>
    %42 = arith.subf %39, %41 : vector<64x128xf32>
    %43 = arith.mulf %42, %39 : vector<64x128xf32>
    %44 = vector.shape_cast %43 : vector<64x128xf32> to vector<1x64x128xf32>
    %cst_20 = arith.constant dense<0.000000e+00> : vector<1xf32>
    %45 = vector.multi_reduction <add>, %44, %cst_20 [1, 2] : vector<1x64x128xf32> to vector<1xf32>
    %46 = vector.shape_cast %45 : vector<1xf32> to vector<1x1x1xf32>
    %47 = vector.extract %46[0, 0, 0] : f32 from vector<1x1x1xf32>
    %c2 = arith.constant 2 : index
    %48 = memref.load %arg8[%c2] : memref<3xf32, #tpu.memory_space<smem>>
    memref.store %47, %arg8[%c2] : memref<3xf32, #tpu.memory_space<smem>>
    %49 = arith.truncf %39 : vector<64x128xf32> to vector<64x128xbf16>
    %c0_21 = arith.constant 0 : index
    %c0_22 = arith.constant 0 : index
    %50 = vector.load %arg5[%c0_21, %c0_22] : memref<128x128xbf16, #tpu.memory_space<vmem>>, vector<128x128xbf16>
    %cst_23 = arith.constant dense<0.000000e+00> : vector<64x128xf32>
    %51 = tpu.matmul %49, %50, %cst_23 {dimension_numbers = #tpu.dot_dimension_numbers<[1], [0], [0], [1], [0, 0, 1, 1], [], []>} : vector<64x128xbf16>, vector<128x128xbf16>, vector<64x128xf32> -> vector<64x128xf32>
    %c0_24 = arith.constant 0 : index
    %c0_25 = arith.constant 0 : index
    %52 = vector.load %arg6[%c0_24, %c0_25] : memref<1x128xf32, #tpu.memory_space<vmem>>, vector<1x128xf32>
    %53 = vector.broadcast %52 : vector<1x128xf32> to vector<64x128xf32>
    %54 = arith.addf %51, %53 : vector<64x128xf32>
    %c0_26 = arith.constant 0 : index
    %c0_27 = arith.constant 0 : index
    %55 = vector.load %arg7[%c0_26, %c0_27] : memref<64x128xf32, #tpu.memory_space<vmem>>, vector<64x128xf32>
    tpu.vector_store %arg7[%c0_26, %c0_27], %54 {strides = array<i32>} : memref<64x128xf32, #tpu.memory_space<vmem>>, vector<64x128xf32>,
    return
  }
}

</mosaic_0001>

<llo_original>
// kernel: graff_forward.1
$region0: #{graff_forward.1}
  #allocation0 [shape = 'u32[]', space=smem, size = 0x4, offset = 0x4, fixed_abs, tag = 'smem constant byte address 0x4 - core index']
  #allocation1 [shape = 'u32[144,128]{1,0:T(1,128)}', space=vmem, size = 0x12000, scoped, tag = 'internal scratch']
  %s0 = inlined_call_operand.vmem [shape: bf16[64,64], index: 0, kind: input, shape index: {}]
  %s1 = inlined_call_operand.vmem [shape: bf16[64,128], index: 1, kind: input, shape index: {}]
  %s2 = inlined_call_operand.vmem [shape: bf16[128,128], index: 2, kind: input, shape index: {}]
  %s3 = inlined_call_operand.vmem [shape: f32[1,128], index: 3, kind: input, shape index: {}]
  %s4 = inlined_call_operand.vmem [shape: bf16[128,128], index: 4, kind: input, shape index: {}]
  %s5 = inlined_call_operand.vmem [shape: bf16[128,128], index: 5, kind: input, shape index: {}]
  %s6 = inlined_call_operand.vmem [shape: f32[1,128], index: 6, kind: input, shape index: {}]
  %s7 = inlined_call_operand.vmem [shape: f32[64,128], index: 7, kind: output, shape index: {0}]
  %s8 = inlined_call_operand.hbm [shape: f32[3], index: 8, kind: output, shape index: {1}]
  %9 = xla_tuple %s7, %s8
  %s10 = sld [smem:[#allocation0]]
  $region46: #{graff_forward.1} parent=0
    _
  %s12 = ssub.s32 1, %s10
  %s13 = scalar_select 0, %s12, %s10
  $region1: #{graff_forward.1} parent=0
    #allocation2 [shape = 'u8[512]{0}', space=smem, size = 0x200, scoped, tag = 'output window, operand 1, single buffered']
    #allocation3 [shape = 's32[1]{0}', space=sflag, size = 0x4, scoped, tag = 'scoped memory for graff_forward.1']
    %14 = vsyncpa [#allocation3], 0
    // Predicated region
    $region2: #{graff_forward.1} parent=1 // pred_check
      _
    $region3: #{graff_forward.1} parent=1 // pred_check_branch
      %16 = sbr.rel (0) target = $region5
    $region4: #{graff_forward.1} parent=1 // pred_region
      _
    $region5: #{graff_forward.1} parent=1 // pred_fallthru
      _
    // Predicated region
    $region6: #{graff_forward.1} parent=1 // pred_check
      _
    $region7: #{graff_forward.1} parent=1 // pred_check_branch
      %18 = sbr.rel (0) target = $region9
    $region8: #{graff_forward.1} parent=1 // pred_region
      _
    $region9: #{graff_forward.1} parent=1 // pred_fallthru
      _
    // Predicated region
    $region10: #{graff_forward.1} parent=1 // pred_check
      _
    $region11: #{graff_forward.1} parent=1 // pred_check_branch
      %20 = sbr.rel (0) target = $region13
    $region12: #{graff_forward.1} parent=1 // pred_region
      _
    $region13: #{graff_forward.1} parent=1 // pred_fallthru
      _
    // Predicated region
    $region14: #{graff_forward.1} parent=1 // pred_check
      _
    $region15: #{graff_forward.1} parent=1 // pred_check_branch
      %22 = sbr.rel (0) target = $region17
    $region16: #{graff_forward.1} parent=1 // pred_region
      _
    $region17: #{graff_forward.1} parent=1 // pred_fallthru
      _
    // Predicated region
    $region18: #{graff_forward.1} parent=1 // pred_check
      _
    $region19: #{graff_forward.1} parent=1 // pred_check_branch
      %24 = sbr.rel (0) target = $region21
    $region20: #{graff_forward.1} parent=1 // pred_region
      _
    $region21: #{graff_forward.1} parent=1 // pred_fallthru
      _
    // Predicated region
    $region22: #{graff_forward.1} parent=1 // pred_check
      _
    $region23: #{graff_forward.1} parent=1 // pred_check_branch
      %26 = sbr.rel (0) target = $region25
    $region24: #{graff_forward.1} parent=1 // pred_region
      _
    $region25: #{graff_forward.1} parent=1 // pred_fallthru
      _
    // Predicated region
    $region26: #{graff_forward.1} parent=1 // pred_check
      _
    $region27: #{graff_forward.1} parent=1 // pred_check_branch
      %28 = sbr.rel (0) target = $region29
    $region28: #{graff_forward.1} parent=1 // pred_region
      _
    $region29: #{graff_forward.1} parent=1 // pred_fallthru
      _
    %v30 = vld [vmem:[%s1] sm:$0xf]
    %v31 = vld [vmem:[%s1 + $0x4] sm:$0xf]
    %v32 = vld [vmem:[%s1 + $0x8] sm:$0xf]
    %v33 = vld [vmem:[%s1 + $0xc] sm:$0xf]
    %v34 = vld [vmem:[%s1 + $0x10] sm:$0xf]
    %v35 = vld [vmem:[%s1 + $0x14] sm:$0xf]
    %v36 = vld [vmem:[%s1 + $0x18] sm:$0xf]
    %v37 = vld [vmem:[%s1 + $0x1c] sm:$0xf]
    %v38 = vld [vmem:[%s2] sm:$0xf]
    %v39 = vld [vmem:[%s2 + $0x4] sm:$0xf]
    %v40 = vld [vmem:[%s2 + $0x8] sm:$0xf]
    %v41 = vld [vmem:[%s2 + $0xc] sm:$0xf]
    %v42 = vld [vmem:[%s2 + $0x10] sm:$0xf]
    %v43 = vld [vmem:[%s2 + $0x14] sm:$0xf]
    %v44 = vld [vmem:[%s2 + $0x18] sm:$0xf]
    %v45 = vld [vmem:[%s2 + $0x1c] sm:$0xf]
    %v46 = vld [vmem:[%s2 + $0x20] sm:$0xf]
    %v47 = vld [vmem:[%s2 + $0x24] sm:$0xf]
    %v48 = vld [vmem:[%s2 + $0x28] sm:$0xf]
    %v49 = vld [vmem:[%s2 + $0x2c] sm:$0xf]
    %v50 = vld [vmem:[%s2 + $0x30] sm:$0xf]
    %v51 = vld [vmem:[%s2 + $0x34] sm:$0xf]
    %v52 = vld [vmem:[%s2 + $0x38] sm:$0xf]
    %v53 = vld [vmem:[%s2 + $0x3c] sm:$0xf]
    %v54 = vld [vmem:[%s3] sm:$0x1]
    %v56 = vlaneseq
    %v57 = vshrl.u32 %v56, 7
    %v58 = vsub.s32 0, %v57
    %v59 = vrot.slane %v54, %v58
    %v69 = vunpack.c.l.b16 %v30
    %v70 = vunpack.c.l.b16 %v31
    %v71 = vunpack.c.l.b16 %v32
    %v72 = vunpack.c.l.b16 %v33
    %v73 = vunpack.c.l.b16 %v34
    %v74 = vunpack.c.l.b16 %v35
    %v75 = vunpack.c.l.b16 %v36
    %v76 = vunpack.c.l.b16 %v37
    %v77 = vpack.c.b16 %v70, %v69
    %v78 = vpack.c.b16 %v72, %v71
    %v79 = vpack.c.b16 %v74, %v73
    %v80 = vpack.c.b16 %v76, %v75
    %v101 = vunpack.c.l.b16 %v38
    %v102 = vunpack.c.l.b16 %v39
    %v103 = vunpack.c.l.b16 %v40
    %v104 = vunpack.c.l.b16 %v41
    %v105 = vunpack.c.l.b16 %v42
    %v106 = vunpack.c.l.b16 %v43
    %v107 = vunpack.c.l.b16 %v44
    %v108 = vunpack.c.l.b16 %v45
    %v109 = vunpack.c.l.b16 %v46
    %v110 = vunpack.c.l.b16 %v47
    %v111 = vunpack.c.l.b16 %v48
    %v112 = vunpack.c.l.b16 %v49
    %v113 = vunpack.c.l.b16 %v50
    %v114 = vunpack.c.l.b16 %v51
    %v115 = vunpack.c.l.b16 %v52
    %v116 = vunpack.c.l.b16 %v53
    %v117 = vpack.c.b16 %v102, %v101
    %v118 = vpack.c.b16 %v104, %v103
    %v119 = vpack.c.b16 %v106, %v105
    %v120 = vpack.c.b16 %v108, %v107
    %v121 = vpack.c.b16 %v110, %v109
    %v122 = vpack.c.b16 %v112, %v111
    %v123 = vpack.c.b16 %v114, %v113
    %v124 = vpack.c.b16 %v116, %v115
    %133 = vmatprep.subr.bf16.mxu0 0
    %134 = vmatpush1.bf16.msra.mxu0 %v124
    %135 = vmatprep.subr.bf16.mxu0 0
    %136 = vmatpush1.bf16.msra.mxu0 %v123
    %137 = vmatprep.subr.bf16.mxu0 0
    %138 = vmatpush1.bf16.msra.mxu0 %v122
    %139 = vmatprep.subr.bf16.mxu0 0
    %140 = vmatpush1.bf16.msra.mxu0 %v121
    %141 = vmatprep.subr.bf16.mxu0 0
    %142 = vmatpush1.bf16.msra.mxu0 %v120
    %143 = vmatprep.subr.bf16.mxu0 0
    %144 = vmatpush1.bf16.msra.mxu0 %v119
    %145 = vmatprep.subr.bf16.mxu0 0
    %146 = vmatpush1.bf16.msra.mxu0 %v118
    %147 = vmatprep.subr.bf16.mxu0 0
    %148 = vmatpush1.bf16.msra.mxu0 %v117
    %149 = vmatprep.subr.bf16.mxu0 0
    %150 = vmatpush2.bf16.msra.mxu0 0
    %151 = vmatprep.subr.bf16.mxu0 0
    %152 = vmatpush2.bf16.msra.mxu0 0
    %153 = vmatprep.subr.bf16.mxu0 0
    %154 = vmatpush2.bf16.msra.mxu0 0
    %155 = vmatprep.subr.bf16.mxu0 0
    %156 = vmatpush2.bf16.msra.mxu0 0
    %157 = vmatprep.subr.bf16.mxu0 0
    %158 = vmatpush2.bf16.msra.mxu0 0
    %159 = vmatprep.subr.bf16.mxu0 0
    %160 = vmatpush2.bf16.msra.mxu0 0
    %161 = vmatprep.subr.bf16.mxu0 0
    %162 = vmatpush2.bf16.msra.mxu0 0
    %163 = vmatprep.subr.bf16.mxu0 0
    %164 = vmatpush2.bf16.msra.mxu0 0
    %165 = vmatprep.mubr.bf16.mxu0 0
    %166 = vmatmul.mubr.bf16.gmra.mxu0 %v77
    %v167 = vpop.f32.mrf.mxu0
    %v168 = vadd.f32 %v59, %v167
    %v169 = vpop.f32.mrf.mxu0
    %v170 = vpop.f32.mrf.mxu0
    %v171 = vadd.f32 %v59, %v170
    %v172 = vpop.f32.mrf.mxu0
    %173 = vmatprep.mubr.bf16.mxu0 0
    %174 = vmatmul.mubr.bf16.gmra.mxu0 %v78
    %v175 = vpop.f32.mrf.mxu0
    %v176 = vadd.f32 %v59, %v175
    %v177 = vpop.f32.mrf.mxu0
    %v178 = vpop.f32.mrf.mxu0
    %v179 = vadd.f32 %v59, %v178
    %v180 = vpop.f32.mrf.mxu0
    %181 = vmatprep.mubr.bf16.mxu0 0
    %182 = vmatmul.mubr.bf16.gmra.mxu0 %v79
    %v183 = vpop.f32.mrf.mxu0
    %v184 = vadd.f32 %v59, %v183
    %v185 = vpop.f32.mrf.mxu0
    %v186 = vpop.f32.mrf.mxu0
    %v187 = vadd.f32 %v59, %v186
    %v188 = vpop.f32.mrf.mxu0
    %189 = vmatprep.mubr.bf16.mxu0 0
    %190 = vmatmul.mubr.bf16.gmra.mxu0 %v80
    %v191 = vpop.f32.mrf.mxu0
    %v192 = vadd.f32 %v59, %v191
    %v193 = vpop.f32.mrf.mxu0
    %v194 = vpop.f32.mrf.mxu0
    %v195 = vadd.f32 %v59, %v194
    %v196 = vpop.f32.mrf.mxu0
    %197 = vdwg.mxu0
    %v198 = vmax.f32 %v168, 0.0
    %v199 = vmax.f32 %v171, 0.0
    %v200 = vmax.f32 %v176, 0.0
    %v201 = vmax.f32 %v179, 0.0
    %v202 = vmax.f32 %v184, 0.0
    %v203 = vmax.f32 %v187, 0.0
    %v204 = vmax.f32 %v192, 0.0
    %v205 = vmax.f32 %v195, 0.0
    %v206 = vld [vmem:[%s0] sm:$0xf]
    %v207 = vld [vmem:[%s0 + $0x4] sm:$0xf]
    %v208 = vld [vmem:[%s0 + $0x8] sm:$0xf]
    %v209 = vld [vmem:[%s0 + $0xc] sm:$0xf]
    %v210 = vld [vmem:[%s0 + $0x10] sm:$0xf]
    %v211 = vld [vmem:[%s0 + $0x14] sm:$0xf]
    %v212 = vld [vmem:[%s0 + $0x18] sm:$0xf]
    %v213 = vld [vmem:[%s0 + $0x1c] sm:$0xf]
    %v214 = vld [vmem:[%s4] sm:$0xf]
    %v215 = vld [vmem:[%s4 + $0x4] sm:$0xf]
    %v216 = vld [vmem:[%s4 + $0x8] sm:$0xf]
    %v217 = vld [vmem:[%s4 + $0xc] sm:$0xf]
    %v218 = vld [vmem:[%s4 + $0x10] sm:$0xf]
    %v219 = vld [vmem:[%s4 + $0x14] sm:$0xf]
    %v220 = vld [vmem:[%s4 + $0x18] sm:$0xf]
    %v221 = vld [vmem:[%s4 + $0x1c] sm:$0xf]
    %v222 = vld [vmem:[%s4 + $0x20] sm:$0xf]
    %v223 = vld [vmem:[%s4 + $0x24] sm:$0xf]
    %v224 = vld [vmem:[%s4 + $0x28] sm:$0xf]
    %v225 = vld [vmem:[%s4 + $0x2c] sm:$0xf]
    %v226 = vld [vmem:[%s4 + $0x30] sm:$0xf]
    %v227 = vld [vmem:[%s4 + $0x34] sm:$0xf]
    %v228 = vld [vmem:[%s4 + $0x38] sm:$0xf]
    %v229 = vld [vmem:[%s4 + $0x3c] sm:$0xf]
    %v230 = vpack.c.bf16 %v199, %v198
    %v231 = vpack.c.bf16 %v201, %v200
    %v232 = vpack.c.bf16 %v203, %v202
    %v233 = vpack.c.bf16 %v205, %v204
    %v242 = vunpack.c.l.b16 %v206
    %v243 = vunpack.c.l.b16 %v207
    %v244 = vunpack.c.l.b16 %v208
    %v245 = vunpack.c.l.b16 %v209
    %v246 = vunpack.c.l.b16 %v210
    %v247 = vunpack.c.l.b16 %v211
    %v248 = vunpack.c.l.b16 %v212
    %v249 = vunpack.c.l.b16 %v213
    %v250 = vpack.c.b16 %v243, %v242
    %v251 = vpack.c.b16 %v245, %v244
    %v252 = vpack.c.b16 %v247, %v246
    %v253 = vpack.c.b16 %v249, %v248
    %vm254 = vcmask 523264
    %v256 = vsel %vm254, %v250, 0
    %v259 = vsel %vm254, %v251, 0
    %v262 = vsel %vm254, %v252, 0
    %v265 = vsel %vm254, %v253, 0
    %267 = vmatprep.subr.bf16.mxu0 0
    %268 = vmatpush1.bf16.msra.mxu0 0
    %269 = vmatprep.subr.bf16.mxu0 0
    %270 = vmatpush1.bf16.msra.mxu0 0
    %271 = vmatprep.subr.bf16.mxu0 0
    %272 = vmatpush1.bf16.msra.mxu0 0
    %273 = vmatprep.subr.bf16.mxu0 0
    %274 = vmatpush1.bf16.msra.mxu0 0
    %275 = vmatprep.subr.bf16.mxu0 0
    %276 = vmatpush1.bf16.msra.mxu0 %v233
    %277 = vmatprep.subr.bf16.mxu0 0
    %278 = vmatpush1.bf16.msra.mxu0 %v232
    %279 = vmatprep.subr.bf16.mxu0 0
    %280 = vmatpush1.bf16.msra.mxu0 %v231
    %281 = vmatprep.subr.bf16.mxu0 0
    %282 = vmatpush1.bf16.msra.mxu0 %v230
    %283 = vmatprep.subr.bf16.mxu0 0
    %284 = vmatpush2.bf16.msra.mxu0 0
    %285 = vmatprep.subr.bf16.mxu0 0
    %286 = vmatpush2.bf16.msra.mxu0 0
    %287 = vmatprep.subr.bf16.mxu0 0
    %288 = vmatpush2.bf16.msra.mxu0 0
    %289 = vmatprep.subr.bf16.mxu0 0
    %290 = vmatpush2.bf16.msra.mxu0 0
    %291 = vmatprep.subr.bf16.mxu0 0
    %292 = vmatpush2.bf16.msra.mxu0 0
    %293 = vmatprep.subr.bf16.mxu0 0
    %294 = vmatpush2.bf16.msra.mxu0 0
    %295 = vmatprep.subr.bf16.mxu0 0
    %296 = vmatpush2.bf16.msra.mxu0 0
    %297 = vmatprep.subr.bf16.mxu0 0
    %298 = vmatpush2.bf16.msra.mxu0 0
    %299 = vmatprep.mubr.bf16.mxu0 0
    %300 = vmatmul.mubr.bf16.gmra.mxu0 %v256
    %v301 = vpop.f32.mrf.mxu0
    %v302 = vadd.f32 0.0, %v301
    %v303 = vpop.f32.mrf.mxu0
    %v304 = vpop.f32.mrf.mxu0
    %v305 = vadd.f32 0.0, %v304
    %v306 = vpop.f32.mrf.mxu0
    %307 = vmatprep.mubr.bf16.mxu0 0
    %308 = vmatmul.mubr.bf16.gmra.mxu0 %v259
    %v309 = vpop.f32.mrf.mxu0
    %v310 = vadd.f32 0.0, %v309
    %v311 = vpop.f32.mrf.mxu0
    %v312 = vpop.f32.mrf.mxu0
    %v313 = vadd.f32 0.0, %v312
    %v314 = vpop.f32.mrf.mxu0
    %315 = vmatprep.mubr.bf16.mxu0 0
    %316 = vmatmul.mubr.bf16.gmra.mxu0 %v262
    %v317 = vpop.f32.mrf.mxu0
    %v318 = vadd.f32 0.0, %v317
    %v319 = vpop.f32.mrf.mxu0
    %v320 = vpop.f32.mrf.mxu0
    %v321 = vadd.f32 0.0, %v320
    %v322 = vpop.f32.mrf.mxu0
    %323 = vmatprep.mubr.bf16.mxu0 0
    %324 = vmatmul.mubr.bf16.gmra.mxu0 %v265
    %v325 = vpop.f32.mrf.mxu0
    %v326 = vadd.f32 0.0, %v325
    %v327 = vpop.f32.mrf.mxu0
    %v328 = vpop.f32.mrf.mxu0
    %v329 = vadd.f32 0.0, %v328
    %v330 = vpop.f32.mrf.mxu0
    %331 = vdwg.mxu0
    %v332 = vsub.f32 %v198, %v302
    %v333 = vsub.f32 %v199, %v305
    %v334 = vsub.f32 %v200, %v310
    %v335 = vsub.f32 %v201, %v313
    %v336 = vsub.f32 %v202, %v318
    %v337 = vsub.f32 %v203, %v321
    %v338 = vsub.f32 %v204, %v326
    %v339 = vsub.f32 %v205, %v329
    %v340 = vmul.f32 %v332, %v198
    %v341 = vmul.f32 %v333, %v199
    %v342 = vmul.f32 %v334, %v200
    %v343 = vmul.f32 %v335, %v201
    %v344 = vmul.f32 %v336, %v202
    %v345 = vmul.f32 %v337, %v203
    %v346 = vmul.f32 %v338, %v204
    %v347 = vmul.f32 %v339, %v205
    %v348 = vadd.f32 %v340, %v341
    %v349 = vadd.f32 %v348, %v342
    %v350 = vadd.f32 %v349, %v343
    %v351 = vadd.f32 %v350, %v344
    %v352 = vadd.f32 %v351, %v345
    %v353 = vadd.f32 %v352, %v346
    %v354 = vadd.f32 %v353, %v347
    %355 = vadd.xlane.f32.xlu0 %v354
    %v356 = vpop.xlane.xlu0 %355
    %v357 = vrot.slane %v356, 4
    %v358 = vadd.f32 %v356, %v357
    %v359 = vrot.slane %v358, 2
    %v360 = vadd.f32 %v358, %v359
    %v361 = vrot.slane %v360, 1
    %v362 = vadd.f32 %v360, %v361
    %s363 = vtos %v362
    %s364 = scalar_lea.smem [#allocation2], 0
    %365 = sst [smem:[%s364]] %s363
    %v366 = vpack.c.bf16 %v305, %v302
    %v367 = vpack.c.bf16 %v313, %v310
    %v368 = vpack.c.bf16 %v321, %v318
    %v369 = vpack.c.bf16 %v329, %v326
    %v386 = vunpack.c.l.b16 %v214
    %v387 = vunpack.c.l.b16 %v215
    %v388 = vunpack.c.l.b16 %v216
    %v389 = vunpack.c.l.b16 %v217
    %v390 = vunpack.c.l.b16 %v218
    %v391 = vunpack.c.l.b16 %v219
    %v392 = vunpack.c.l.b16 %v220
    %v393 = vunpack.c.l.b16 %v221
    %v394 = vunpack.c.l.b16 %v222
    %v395 = vunpack.c.l.b16 %v223
    %v396 = vunpack.c.l.b16 %v224
    %v397 = vunpack.c.l.b16 %v225
    %v398 = vunpack.c.l.b16 %v226
    %v399 = vunpack.c.l.b16 %v227
    %v400 = vunpack.c.l.b16 %v228
    %v401 = vunpack.c.l.b16 %v229
    %v402 = vpack.c.b16 %v387, %v386
    %v403 = vpack.c.b16 %v389, %v388
    %v404 = vpack.c.b16 %v391, %v390
    %v405 = vpack.c.b16 %v393, %v392
    %v406 = vpack.c.b16 %v395, %v394
    %v407 = vpack.c.b16 %v397, %v396
    %v408 = vpack.c.b16 %v399, %v398
    %v409 = vpack.c.b16 %v401, %v400
    %418 = vmatprep.subr.bf16.mxu0 0
    %419 = vmatpush1.bf16.msra.mxu0 %v409
    %420 = vmatprep.subr.bf16.mxu0 0
    %421 = vmatpush1.bf16.msra.mxu0 %v408
    %422 = vmatprep.subr.bf16.mxu0 0
    %423 = vmatpush1.bf16.msra.mxu0 %v407
    %424 = vmatprep.subr.bf16.mxu0 0
    %425 = vmatpush1.bf16.msra.mxu0 %v406
    %426 = vmatprep.subr.bf16.mxu0 0
    %427 = vmatpush1.bf16.msra.mxu0 %v405
    %428 = vmatprep.subr.bf16.mxu0 0
    %429 = vmatpush1.bf16.msra.mxu0 %v404
    %430 = vmatprep.subr.bf16.mxu0 0
    %431 = vmatpush1.bf16.msra.mxu0 %v403
    %432 = vmatprep.subr.bf16.mxu0 0
    %433 = vmatpush1.bf16.msra.mxu0 %v402
    %434 = vmatprep.subr.bf16.mxu0 0
    %435 = vmatpush2.bf16.msra.mxu0 0
    %436 = vmatprep.subr.bf16.mxu0 0
    %437 = vmatpush2.bf16.msra.mxu0 0
    %438 = vmatprep.subr.bf16.mxu0 0
    %439 = vmatpush2.bf16.msra.mxu0 0
    %440 = vmatprep.subr.bf16.mxu0 0
    %441 = vmatpush2.bf16.msra.mxu0 0
    %442 = vmatprep.subr.bf16.mxu0 0
    %443 = vmatpush2.bf16.msra.mxu0 0
    %444 = vmatprep.subr.bf16.mxu0 0
    %445 = vmatpush2.bf16.msra.mxu0 0
    %446 = vmatprep.subr.bf16.mxu0 0
    %447 = vmatpush2.bf16.msra.mxu0 0
    %448 = vmatprep.subr.bf16.mxu0 0
    %449 = vmatpush2.bf16.msra.mxu0 0
    %450 = vmatprep.mubr.bf16.mxu0 0
    %451 = vmatmul.mubr.bf16.gmra.mxu0 %v366
    %v452 = vpop.f32.mrf.mxu0
    %v453 = vadd.f32 0.0, %v452
    %v454 = vpop.f32.mrf.mxu0
    %v455 = vpop.f32.mrf.mxu0
    %v456 = vadd.f32 0.0, %v455
    %v457 = vpop.f32.mrf.mxu0
    %458 = vmatprep.mubr.bf16.mxu0 0
    %459 = vmatmul.mubr.bf16.gmra.mxu0 %v367
    %v460 = vpop.f32.mrf.mxu0
    %v461 = vadd.f32 0.0, %v460
    %v462 = vpop.f32.mrf.mxu0
    %v463 = vpop.f32.mrf.mxu0
    %v464 = vadd.f32 0.0, %v463
    %v465 = vpop.f32.mrf.mxu0
    %466 = vmatprep.mubr.bf16.mxu0 0
    %467 = vmatmul.mubr.bf16.gmra.mxu0 %v368
    %v468 = vpop.f32.mrf.mxu0
    %v469 = vadd.f32 0.0, %v468
    %v470 = vpop.f32.mrf.mxu0
    %v471 = vpop.f32.mrf.mxu0
    %v472 = vadd.f32 0.0, %v471
    %v473 = vpop.f32.mrf.mxu0
    %474 = vmatprep.mubr.bf16.mxu0 0
    %475 = vmatmul.mubr.bf16.gmra.mxu0 %v369
    %v476 = vpop.f32.mrf.mxu0
    %v477 = vadd.f32 0.0, %v476
    %v478 = vpop.f32.mrf.mxu0
    %v479 = vpop.f32.mrf.mxu0
    %v480 = vadd.f32 0.0, %v479
    %v481 = vpop.f32.mrf.mxu0
    %482 = vdwg.mxu0
    %v483 = vadd.f32 %v198, %v453
    %v484 = vadd.f32 %v199, %v456
    %v485 = vadd.f32 %v200, %v461
    %v486 = vadd.f32 %v201, %v464
    %v487 = vadd.f32 %v202, %v469
    %v488 = vadd.f32 %v203, %v472
    %v489 = vadd.f32 %v204, %v477
    %v490 = vadd.f32 %v205, %v480
    %v491 = vmax.f32 %v483, 0.0
    %v492 = vmax.f32 %v484, 0.0
    %v493 = vmax.f32 %v485, 0.0
    %v494 = vmax.f32 %v486, 0.0
    %v495 = vmax.f32 %v487, 0.0
    %v496 = vmax.f32 %v488, 0.0
    %v497 = vmax.f32 %v489, 0.0
    %v498 = vmax.f32 %v490, 0.0
    %v499 = vadd.f32 %v198, %v491
    %v500 = vadd.f32 %v199, %v492
    %v501 = vadd.f32 %v200, %v493
    %v502 = vadd.f32 %v201, %v494
    %v503 = vadd.f32 %v202, %v495
    %v504 = vadd.f32 %v203, %v496
    %v505 = vadd.f32 %v204, %v497
    %v506 = vadd.f32 %v205, %v498
    %v507 = vpack.c.bf16 %v500, %v499
    %v508 = vpack.c.bf16 %v502, %v501
    %v509 = vpack.c.bf16 %v504, %v503
    %v510 = vpack.c.bf16 %v506, %v505
    %511 = vmatprep.subr.bf16.mxu0 0
    %512 = vmatpush1.bf16.msra.mxu0 0
    %513 = vmatprep.subr.bf16.mxu0 0
    %514 = vmatpush1.bf16.msra.mxu0 0
    %515 = vmatprep.subr.bf16.mxu0 0
    %516 = vmatpush1.bf16.msra.mxu0 0
    %517 = vmatprep.subr.bf16.mxu0 0
    %518 = vmatpush1.bf16.msra.mxu0 0
    %519 = vmatprep.subr.bf16.mxu0 0
    %520 = vmatpush1.bf16.msra.mxu0 %v510
    %521 = vmatprep.subr.bf16.mxu0 0
    %522 = vmatpush1.bf16.msra.mxu0 %v509
    %523 = vmatprep.subr.bf16.mxu0 0
    %524 = vmatpush1.bf16.msra.mxu0 %v508
    %525 = vmatprep.subr.bf16.mxu0 0
    %526 = vmatpush1.bf16.msra.mxu0 %v507
    %527 = vmatprep.subr.bf16.mxu0 0
    %528 = vmatpush2.bf16.msra.mxu0 0
    %529 = vmatprep.subr.bf16.mxu0 0
    %530 = vmatpush2.bf16.msra.mxu0 0
    %531 = vmatprep.subr.bf16.mxu0 0
    %532 = vmatpush2.bf16.msra.mxu0 0
    %533 = vmatprep.subr.bf16.mxu0 0
    %534 = vmatpush2.bf16.msra.mxu0 0
    %535 = vmatprep.subr.bf16.mxu0 0
    %536 = vmatpush2.bf16.msra.mxu0 0
    %537 = vmatprep.subr.bf16.mxu0 0
    %538 = vmatpush2.bf16.msra.mxu0 0
    %539 = vmatprep.subr.bf16.mxu0 0
    %540 = vmatpush2.bf16.msra.mxu0 0
    %541 = vmatprep.subr.bf16.mxu0 0
    %542 = vmatpush2.bf16.msra.mxu0 0
    %543 = vmatprep.mubr.bf16.mxu0 0
    %544 = vmatmul.mubr.bf16.gmra.mxu0 %v256
    %v545 = vpop.f32.mrf.mxu0
    %v546 = vadd.f32 0.0, %v545
    %v547 = vpop.f32.mrf.mxu0
    %v548 = vpop.f32.mrf.mxu0
    %v549 = vadd.f32 0.0, %v548
    %v550 = vpop.f32.mrf.mxu0
    %551 = vmatprep.mubr.bf16.mxu0 0
    %552 = vmatmul.mubr.bf16.gmra.mxu0 %v259
    %v553 = vpop.f32.mrf.mxu0
    %v554 = vadd.f32 0.0, %v553
    %v555 = vpop.f32.mrf.mxu0
    %v556 = vpop.f32.mrf.mxu0
    %v557 = vadd.f32 0.0, %v556
    %v558 = vpop.f32.mrf.mxu0
    %559 = vmatprep.mubr.bf16.mxu0 0
    %560 = vmatmul.mubr.bf16.gmra.mxu0 %v262
    %v561 = vpop.f32.mrf.mxu0
    %v562 = vadd.f32 0.0, %v561
    %v563 = vpop.f32.mrf.mxu0
    %v564 = vpop.f32.mrf.mxu0
    %v565 = vadd.f32 0.0, %v564
    %v566 = vpop.f32.mrf.mxu0
    %567 = vmatprep.mubr.bf16.mxu0 0
    %568 = vmatmul.mubr.bf16.gmra.mxu0 %v265
    %v569 = vpop.f32.mrf.mxu0
    %v570 = vadd.f32 0.0, %v569
    %v571 = vpop.f32.mrf.mxu0
    %v572 = vpop.f32.mrf.mxu0
    %v573 = vadd.f32 0.0, %v572
    %v574 = vpop.f32.mrf.mxu0
    %575 = vdwg.mxu0
    %v576 = vsub.f32 %v499, %v546
    %v577 = vsub.f32 %v500, %v549
    %v578 = vsub.f32 %v501, %v554
    %v579 = vsub.f32 %v502, %v557
    %v580 = vsub.f32 %v503, %v562
    %v581 = vsub.f32 %v504, %v565
    %v582 = vsub.f32 %v505, %v570
    %v583 = vsub.f32 %v506, %v573
    %v584 = vmul.f32 %v576, %v499
    %v585 = vmul.f32 %v577, %v500
    %v586 = vmul.f32 %v578, %v501
    %v587 = vmul.f32 %v579, %v502
    %v588 = vmul.f32 %v580, %v503
    %v589 = vmul.f32 %v581, %v504
    %v590 = vmul.f32 %v582, %v505
    %v591 = vmul.f32 %v583, %v506
    %v592 = vadd.f32 %v584, %v585
    %v593 = vadd.f32 %v592, %v586
    %v594 = vadd.f32 %v593, %v587
    %v595 = vadd.f32 %v594, %v588
    %v596 = vadd.f32 %v595, %v589
    %v597 = vadd.f32 %v596, %v590
    %v598 = vadd.f32 %v597, %v591
    %599 = vadd.xlane.f32.xlu0 %v598
    %v600 = vpop.xlane.xlu0 %599
    %v601 = vrot.slane %v600, 4
    %v602 = vadd.f32 %v600, %v601
    %v603 = vrot.slane %v602, 2
    %v604 = vadd.f32 %v602, %v603
    %v605 = vrot.slane %v604, 1
    %v606 = vadd.f32 %v604, %v605
    %s607 = vtos %v606
    %s608 = scalar_lea.smem [#allocation2], 1
    %609 = sst [smem:[%s608]] %s607
    %v610 = vpack.c.bf16 %v549, %v546
    %v611 = vpack.c.bf16 %v557, %v554
    %v612 = vpack.c.bf16 %v565, %v562
    %v613 = vpack.c.bf16 %v573, %v570
    %614 = vmatprep.subr.bf16.mxu0 0
    %615 = vmatpush1.bf16.msra.mxu0 %v409
    %616 = vmatprep.subr.bf16.mxu0 0
    %617 = vmatpush1.bf16.msra.mxu0 %v408
    %618 = vmatprep.subr.bf16.mxu0 0
    %619 = vmatpush1.bf16.msra.mxu0 %v407
    %620 = vmatprep.subr.bf16.mxu0 0
    %621 = vmatpush1.bf16.msra.mxu0 %v406
    %622 = vmatprep.subr.bf16.mxu0 0
    %623 = vmatpush1.bf16.msra.mxu0 %v405
    %624 = vmatprep.subr.bf16.mxu0 0
    %625 = vmatpush1.bf16.msra.mxu0 %v404
    %626 = vmatprep.subr.bf16.mxu0 0
    %627 = vmatpush1.bf16.msra.mxu0 %v403
    %628 = vmatprep.subr.bf16.mxu0 0
    %629 = vmatpush1.bf16.msra.mxu0 %v402
    %630 = vmatprep.subr.bf16.mxu0 0
    %631 = vmatpush2.bf16.msra.mxu0 0
    %632 = vmatprep.subr.bf16.mxu0 0
    %633 = vmatpush2.bf16.msra.mxu0 0
    %634 = vmatprep.subr.bf16.mxu0 0
    %635 = vmatpush2.bf16.msra.mxu0 0
    %636 = vmatprep.subr.bf16.mxu0 0
    %637 = vmatpush2.bf16.msra.mxu0 0
    %638 = vmatprep.subr.bf16.mxu0 0
    %639 = vmatpush2.bf16.msra.mxu0 0
    %640 = vmatprep.subr.bf16.mxu0 0
    %641 = vmatpush2.bf16.msra.mxu0 0
    %642 = vmatprep.subr.bf16.mxu0 0
    %643 = vmatpush2.bf16.msra.mxu0 0
    %644 = vmatprep.subr.bf16.mxu0 0
    %645 = vmatpush2.bf16.msra.mxu0 0
    %646 = vmatprep.mubr.bf16.mxu0 0
    %647 = vmatmul.mubr.bf16.gmra.mxu0 %v610
    %v648 = vpop.f32.mrf.mxu0
    %v649 = vadd.f32 0.0, %v648
    %v650 = vpop.f32.mrf.mxu0
    %v651 = vpop.f32.mrf.mxu0
    %v652 = vadd.f32 0.0, %v651
    %v653 = vpop.f32.mrf.mxu0
    %654 = vmatprep.mubr.bf16.mxu0 0
    %655 = vmatmul.mubr.bf16.gmra.mxu0 %v611
    %v656 = vpop.f32.mrf.mxu0
    %v657 = vadd.f32 0.0, %v656
    %v658 = vpop.f32.mrf.mxu0
    %v659 = vpop.f32.mrf.mxu0
    %v660 = vadd.f32 0.0, %v659
    %v661 = vpop.f32.mrf.mxu0
    %662 = vmatprep.mubr.bf16.mxu0 0
    %663 = vmatmul.mubr.bf16.gmra.mxu0 %v612
    %v664 = vpop.f32.mrf.mxu0
    %v665 = vadd.f32 0.0, %v664
    %v666 = vpop.f32.mrf.mxu0
    %v667 = vpop.f32.mrf.mxu0
    %v668 = vadd.f32 0.0, %v667
    %v669 = vpop.f32.mrf.mxu0
    %670 = vmatprep.mubr.bf16.mxu0 0
    %671 = vmatmul.mubr.bf16.gmra.mxu0 %v613
    %v672 = vpop.f32.mrf.mxu0
    %v673 = vadd.f32 0.0, %v672
    %v674 = vpop.f32.mrf.mxu0
    %v675 = vpop.f32.mrf.mxu0
    %v676 = vadd.f32 0.0, %v675
    %v677 = vpop.f32.mrf.mxu0
    %678 = vdwg.mxu0
    %v679 = vadd.f32 %v499, %v649
    %v680 = vadd.f32 %v500, %v652
    %v681 = vadd.f32 %v501, %v657
    %v682 = vadd.f32 %v502, %v660
    %v683 = vadd.f32 %v503, %v665
    %v684 = vadd.f32 %v504, %v668
    %v685 = vadd.f32 %v505, %v673
    %v686 = vadd.f32 %v506, %v676
    %v687 = vmax.f32 %v679, 0.0
    %v688 = vmax.f32 %v680, 0.0
    %v689 = vmax.f32 %v681, 0.0
    %v690 = vmax.f32 %v682, 0.0
    %v691 = vmax.f32 %v683, 0.0
    %v692 = vmax.f32 %v684, 0.0
    %v693 = vmax.f32 %v685, 0.0
    %v694 = vmax.f32 %v686, 0.0
    %v695 = vadd.f32 %v499, %v687
    %v696 = vadd.f32 %v500, %v688
    %v697 = vadd.f32 %v501, %v689
    %v698 = vadd.f32 %v502, %v690
    %v699 = vadd.f32 %v503, %v691
    %v700 = vadd.f32 %v504, %v692
    %v701 = vadd.f32 %v505, %v693
    %v702 = vadd.f32 %v506, %v694
    %v703 = vpack.c.bf16 %v696, %v695
    %v704 = vpack.c.bf16 %v698, %v697
    %v705 = vpack.c.bf16 %v700, %v699
    %v706 = vpack.c.bf16 %v702, %v701
    %707 = vmatprep.subr.bf16.mxu0 0
    %708 = vmatpush1.bf16.msra.mxu0 0
    %709 = vmatprep.subr.bf16.mxu0 0
    %710 = vmatpush1.bf16.msra.mxu0 0
    %711 = vmatprep.subr.bf16.mxu0 0
    %712 = vmatpush1.bf16.msra.mxu0 0
    %713 = vmatprep.subr.bf16.mxu0 0
    %714 = vmatpush1.bf16.msra.mxu0 0
    %715 = vmatprep.subr.bf16.mxu0 0
    %716 = vmatpush1.bf16.msra.mxu0 %v706
    %717 = vmatprep.subr.bf16.mxu0 0
    %718 = vmatpush1.bf16.msra.mxu0 %v705
    %719 = vmatprep.subr.bf16.mxu0 0
    %720 = vmatpush1.bf16.msra.mxu0 %v704
    %721 = vmatprep.subr.bf16.mxu0 0
    %722 = vmatpush1.bf16.msra.mxu0 %v703
    %723 = vmatprep.subr.bf16.mxu0 0
    %724 = vmatpush2.bf16.msra.mxu0 0
    %725 = vmatprep.subr.bf16.mxu0 0
    %726 = vmatpush2.bf16.msra.mxu0 0
    %727 = vmatprep.subr.bf16.mxu0 0
    %728 = vmatpush2.bf16.msra.mxu0 0
    %729 = vmatprep.subr.bf16.mxu0 0
    %730 = vmatpush2.bf16.msra.mxu0 0
    %731 = vmatprep.subr.bf16.mxu0 0
    %732 = vmatpush2.bf16.msra.mxu0 0
    %733 = vmatprep.subr.bf16.mxu0 0
    %734 = vmatpush2.bf16.msra.mxu0 0
    %735 = vmatprep.subr.bf16.mxu0 0
    %736 = vmatpush2.bf16.msra.mxu0 0
    %737 = vmatprep.subr.bf16.mxu0 0
    %738 = vmatpush2.bf16.msra.mxu0 0
    %739 = vmatprep.mubr.bf16.mxu0 0
    %740 = vmatmul.mubr.bf16.gmra.mxu0 %v256
    %v741 = vpop.f32.mrf.mxu0
    %v742 = vadd.f32 0.0, %v741
    %v743 = vpop.f32.mrf.mxu0
    %v744 = vpop.f32.mrf.mxu0
    %v745 = vadd.f32 0.0, %v744
    %v746 = vpop.f32.mrf.mxu0
    %747 = vmatprep.mubr.bf16.mxu0 0
    %748 = vmatmul.mubr.bf16.gmra.mxu0 %v259
    %v749 = vpop.f32.mrf.mxu0
    %v750 = vadd.f32 0.0, %v749
    %v751 = vpop.f32.mrf.mxu0
    %v752 = vpop.f32.mrf.mxu0
    %v753 = vadd.f32 0.0, %v752
    %v754 = vpop.f32.mrf.mxu0
    %755 = vmatprep.mubr.bf16.mxu0 0
    %756 = vmatmul.mubr.bf16.gmra.mxu0 %v262
    %v757 = vpop.f32.mrf.mxu0
    %v758 = vadd.f32 0.0, %v757
    %v759 = vpop.f32.mrf.mxu0
    %v760 = vpop.f32.mrf.mxu0
    %v761 = vadd.f32 0.0, %v760
    %v762 = vpop.f32.mrf.mxu0
    %763 = vmatprep.mubr.bf16.mxu0 0
    %764 = vmatmul.mubr.bf16.gmra.mxu0 %v265
    %v765 = vpop.f32.mrf.mxu0
    %v766 = vadd.f32 0.0, %v765
    %v767 = vpop.f32.mrf.mxu0
    %v768 = vpop.f32.mrf.mxu0
    %v769 = vadd.f32 0.0, %v768
    %v770 = vpop.f32.mrf.mxu0
    %771 = vdwg.mxu0
    %v772 = vsub.f32 %v695, %v742
    %v773 = vsub.f32 %v696, %v745
    %v774 = vsub.f32 %v697, %v750
    %v775 = vsub.f32 %v698, %v753
    %v776 = vsub.f32 %v699, %v758
    %v777 = vsub.f32 %v700, %v761
    %v778 = vsub.f32 %v701, %v766
    %v779 = vsub.f32 %v702, %v769
    %v780 = vmul.f32 %v772, %v695
    %v781 = vmul.f32 %v773, %v696
    %v782 = vmul.f32 %v774, %v697
    %v783 = vmul.f32 %v775, %v698
    %v784 = vmul.f32 %v776, %v699
    %v785 = vmul.f32 %v777, %v700
    %v786 = vmul.f32 %v778, %v701
    %v787 = vmul.f32 %v779, %v702
    %v788 = vadd.f32 %v780, %v781
    %v789 = vadd.f32 %v788, %v782
    %v790 = vadd.f32 %v789, %v783
    %v791 = vadd.f32 %v790, %v784
    %v792 = vadd.f32 %v791, %v785
    %v793 = vadd.f32 %v792, %v786
    %v794 = vadd.f32 %v793, %v787
    %795 = vadd.xlane.f32.xlu0 %v794
    %v796 = vpop.xlane.xlu0 %795
    %v797 = vrot.slane %v796, 4
    %v798 = vadd.f32 %v796, %v797
    %v799 = vrot.slane %v798, 2
    %v800 = vadd.f32 %v798, %v799
    %v801 = vrot.slane %v800, 1
    %v802 = vadd.f32 %v800, %v801
    %s803 = vtos %v802
    %s804 = scalar_lea.smem [#allocation2], 2
    %805 = sst [smem:[%s804]] %s803
    %v806 = vld [vmem:[%s5] sm:$0xf]
    %v807 = vld [vmem:[%s5 + $0x4] sm:$0xf]
    %v808 = vld [vmem:[%s5 + $0x8] sm:$0xf]
    %v809 = vld [vmem:[%s5 + $0xc] sm:$0xf]
    %v810 = vld [vmem:[%s5 + $0x10] sm:$0xf]
    %v811 = vld [vmem:[%s5 + $0x14] sm:$0xf]
    %v812 = vld [vmem:[%s5 + $0x18] sm:$0xf]
    %v813 = vld [vmem:[%s5 + $0x1c] sm:$0xf]
    %v814 = vld [vmem:[%s5 + $0x20] sm:$0xf]
    %v815 = vld [vmem:[%s5 + $0x24] sm:$0xf]
    %v816 = vld [vmem:[%s5 + $0x28] sm:$0xf]
    %v817 = vld [vmem:[%s5 + $0x2c] sm:$0xf]
    %v818 = vld [vmem:[%s5 + $0x30] sm:$0xf]
    %v819 = vld [vmem:[%s5 + $0x34] sm:$0xf]
    %v820 = vld [vmem:[%s5 + $0x38] sm:$0xf]
    %v821 = vld [vmem:[%s5 + $0x3c] sm:$0xf]
    %v822 = vld [vmem:[%s6] sm:$0x1]
    %v824 = vlaneseq
    %v825 = vshrl.u32 %v824, 7
    %v826 = vsub.s32 0, %v825
    %v827 = vrot.slane %v822, %v826
    %v845 = vunpack.c.l.b16 %v806
    %v846 = vunpack.c.l.b16 %v807
    %v847 = vunpack.c.l.b16 %v808
    %v848 = vunpack.c.l.b16 %v809
    %v849 = vunpack.c.l.b16 %v810
    %v850 = vunpack.c.l.b16 %v811
    %v851 = vunpack.c.l.b16 %v812
    %v852 = vunpack.c.l.b16 %v813
    %v853 = vunpack.c.l.b16 %v814
    %v854 = vunpack.c.l.b16 %v815
    %v855 = vunpack.c.l.b16 %v816
    %v856 = vunpack.c.l.b16 %v817
    %v857 = vunpack.c.l.b16 %v818
    %v858 = vunpack.c.l.b16 %v819
    %v859 = vunpack.c.l.b16 %v820
    %v860 = vunpack.c.l.b16 %v821
    %v861 = vpack.c.b16 %v846, %v845
    %v862 = vpack.c.b16 %v848, %v847
    %v863 = vpack.c.b16 %v850, %v849
    %v864 = vpack.c.b16 %v852, %v851
    %v865 = vpack.c.b16 %v854, %v853
    %v866 = vpack.c.b16 %v856, %v855
    %v867 = vpack.c.b16 %v858, %v857
    %v868 = vpack.c.b16 %v860, %v859
    %877 = vmatprep.subr.bf16.mxu0 0
    %878 = vmatpush1.bf16.msra.mxu0 %v868
    %879 = vmatprep.subr.bf16.mxu0 0
    %880 = vmatpush1.bf16.msra.mxu0 %v867
    %881 = vmatprep.subr.bf16.mxu0 0
    %882 = vmatpush1.bf16.msra.mxu0 %v866
    %883 = vmatprep.subr.bf16.mxu0 0
    %884 = vmatpush1.bf16.msra.mxu0 %v865
    %885 = vmatprep.subr.bf16.mxu0 0
    %886 = vmatpush1.bf16.msra.mxu0 %v864
    %887 = vmatprep.subr.bf16.mxu0 0
    %888 = vmatpush1.bf16.msra.mxu0 %v863
    %889 = vmatprep.subr.bf16.mxu0 0
    %890 = vmatpush1.bf16.msra.mxu0 %v862
    %891 = vmatprep.subr.bf16.mxu0 0
    %892 = vmatpush1.bf16.msra.mxu0 %v861
    %893 = vmatprep.subr.bf16.mxu0 0
    %894 = vmatpush2.bf16.msra.mxu0 0
    %895 = vmatprep.subr.bf16.mxu0 0
    %896 = vmatpush2.bf16.msra.mxu0 0
    %897 = vmatprep.subr.bf16.mxu0 0
    %898 = vmatpush2.bf16.msra.mxu0 0
    %899 = vmatprep.subr.bf16.mxu0 0
    %900 = vmatpush2.bf16.msra.mxu0 0
    %901 = vmatprep.subr.bf16.mxu0 0
    %902 = vmatpush2.bf16.msra.mxu0 0
    %903 = vmatprep.subr.bf16.mxu0 0
    %904 = vmatpush2.bf16.msra.mxu0 0
    %905 = vmatprep.subr.bf16.mxu0 0
    %906 = vmatpush2.bf16.msra.mxu0 0
    %907 = vmatprep.subr.bf16.mxu0 0
    %908 = vmatpush2.bf16.msra.mxu0 0
    %909 = vmatprep.mubr.bf16.mxu0 0
    %910 = vmatmul.mubr.bf16.gmra.mxu0 %v703
    %v911 = vpop.f32.mrf.mxu0
    %v912 = vadd.f32 %v827, %v911
    %v913 = vpop.f32.mrf.mxu0
    %v914 = vpop.f32.mrf.mxu0
    %v915 = vadd.f32 %v827, %v914
    %v916 = vpop.f32.mrf.mxu0
    %917 = vmatprep.mubr.bf16.mxu0 0
    %918 = vmatmul.mubr.bf16.gmra.mxu0 %v704
    %v919 = vpop.f32.mrf.mxu0
    %v920 = vadd.f32 %v827, %v919
    %v921 = vpop.f32.mrf.mxu0
    %v922 = vpop.f32.mrf.mxu0
    %v923 = vadd.f32 %v827, %v922
    %v924 = vpop.f32.mrf.mxu0
    %925 = vmatprep.mubr.bf16.mxu0 0
    %926 = vmatmul.mubr.bf16.gmra.mxu0 %v705
    %v927 = vpop.f32.mrf.mxu0
    %v928 = vadd.f32 %v827, %v927
    %v929 = vpop.f32.mrf.mxu0
    %v930 = vpop.f32.mrf.mxu0
    %v931 = vadd.f32 %v827, %v930
    %v932 = vpop.f32.mrf.mxu0
    %933 = vmatprep.mubr.bf16.mxu0 0
    %934 = vmatmul.mubr.bf16.gmra.mxu0 %v706
    %v935 = vpop.f32.mrf.mxu0
    %v936 = vadd.f32 %v827, %v935
    %v937 = vpop.f32.mrf.mxu0
    %v938 = vpop.f32.mrf.mxu0
    %v939 = vadd.f32 %v827, %v938
    %v940 = vpop.f32.mrf.mxu0
    %941 = vdwg.mxu0
    %942 = vst [vmem:[%s7] sm:$0xff] %v912
    %943 = vst [vmem:[%s7 + $0x8] sm:$0xff] %v915
    %944 = vst [vmem:[%s7 + $0x10] sm:$0xff] %v920
    %945 = vst [vmem:[%s7 + $0x18] sm:$0xff] %v923
    %946 = vst [vmem:[%s7 + $0x20] sm:$0xff] %v928
    %947 = vst [vmem:[%s7 + $0x28] sm:$0xff] %v931
    %948 = vst [vmem:[%s7 + $0x30] sm:$0xff] %v936
    %949 = vst [vmem:[%s7 + $0x38] sm:$0xff] %v939
    // Predicated region
    $region30: #{graff_forward.1} parent=1 // pred_check
      _
    $region31: #{graff_forward.1} parent=1 // pred_check_branch
      %951 = sbr.rel (0) target = $region33
    $region32: #{graff_forward.1} parent=1 // pred_region
      _
    $region33: #{graff_forward.1} parent=1 // pred_fallthru
      _
    // Predicated region
    $region34: #{graff_forward.1} parent=1 // pred_check
      _
    $region35: #{graff_forward.1} parent=1 // pred_check_branch
      %953 = sbr.rel (0) target = $region37
    $region36: #{graff_forward.1} parent=1 // pred_region
      %s955 = ssub.s32 16, 16
      %956 = vsyncadd [#allocation3], %s955
      %959 = dma.smem_to_hbm [#allocation2], 16, %s8, [#allocation3]
    $region37: #{graff_forward.1} parent=1 // pred_fallthru
      _
    // Predicated region
    $region38: #{graff_forward.1} parent=1 // pred_check
      _
    $region39: #{graff_forward.1} parent=1 // pred_check_branch
      %961 = sbr.rel (0) target = $region41
    $region40: #{graff_forward.1} parent=1 // pred_region
      _
    $region41: #{graff_forward.1} parent=1 // pred_fallthru
      _
    // Predicated region
    $region42: #{graff_forward.1} parent=1 // pred_check
      _
    $region43: #{graff_forward.1} parent=1 // pred_check_branch
      %963 = sbr.rel (0) target = $region45
    $region44: #{graff_forward.1} parent=1 // pred_region
      %964 = dma.done [#allocation3], 16
    $region45: #{graff_forward.1} parent=1 // pred_fallthru
      _
    %965 = sfence
    %966 = vsyncpa [#allocation3], 1

</llo_original>
